<compile_context>
chip_gen: v7x
topology: tpu7x:2x2x1
jax: 0.10.0
libtpu: 0.0.40
codegen_flags: <defaults>
</compile_context>

<pallas_src>
import jax
import jax.numpy as jnp
from jax.experimental import pallas as pl
from jax.experimental.pallas import tpu as pltpu

SUBLANE = 8


def _round_up(x, m):
    return ((x + m - 1) // m) * m


def _classifier_kernel(x_ref, w_ref, b_ref, o_ref):
    # Linear head on one M-tile: out = X @ W + b, f32 operands, f32 MXU acc.
    acc = jnp.dot(x_ref[...], w_ref[...], preferred_element_type=jnp.float32)
    o_ref[...] = (acc + b_ref[...]).astype(o_ref.dtype)


def token_classifier_head(seq_out, weight, bias, *, tm=1024):
    """seq_out: (B, S, H) f32; weight: (n_labels, H); bias: (n_labels,).

    Returns logits (B, S, n_labels) f32.
    """
    B, S, H = seq_out.shape
    L = weight.shape[0]
    M = B * S

    x = seq_out.reshape(M, H)                       # free view, stays f32
    w_t = weight.T.astype(jnp.float32)              # (H, L), resident
    b2d = bias.astype(jnp.float32).reshape(1, L)    # (1, L), resident

    # --- M tiling: multiple of 8 sublanes; keep >=2 tiles when M allows so the
    #     "parallel" axis can shard across both v7x TensorCores. ---
    if M < SUBLANE:
        TM = M                                      # block == full dim (allowed)
    else:
        M8 = _round_up(M, SUBLANE)
        TM = min(tm, M8)
        half = _round_up(pl.cdiv(M8, 2), SUBLANE)
        TM = max(SUBLANE, min(TM, half))
    grid = (pl.cdiv(M, TM),)

    # VMEM budget: double-buffered X tile + out tile, resident W + bias.
    tile_bytes = (2 * TM * H * 4      # X tile, f32, 2 buffers
                  + 2 * TM * L * 4    # out tile, f32, 2 buffers
                  + 2 * H * L * 4     # W (resident; default buffering)
                  + 2 * L * 4)        # bias
    vmem_limit = int(min(max(2 * tile_bytes, 16 << 20), 48 << 20))

    cost = pl.CostEstimate(
        flops=2 * M * H * L,
        transcendentals=0,
        bytes_accessed=M * H * 4 + H * L * 4 + L * 4 + M * L * 4,
    )

    out = pl.pallas_call(
        _classifier_kernel,
        out_shape=jax.ShapeDtypeStruct((M, L), jnp.float32),
        grid_spec=pltpu.PrefetchScalarGridSpec(
            num_scalar_prefetch=0,
            grid=grid,
            in_specs=[
                pl.BlockSpec((TM, H), lambda i: (i, 0)),   # X: tiled over M
                pl.BlockSpec((H, L), lambda i: (0, 0)),    # W: resident
                pl.BlockSpec((1, L), lambda i: (0, 0)),    # b: resident
            ],
            out_specs=pl.BlockSpec((TM, L), lambda i: (i, 0)),
        ),
        compiler_params=pltpu.CompilerParams(
            dimension_semantics=("parallel",),  # v7x megacore; no-op v5e/v6e
            vmem_limit_bytes=vmem_limit,
        ),
        cost_estimate=cost,
    )(x, w_t, b2d)

    return out.reshape(B, S, L)


def base_model(input_ids, embedding_table):
    """Stand-in for the external base embedding model: token embedding lookup.
    Returns hidden states of shape (B, S, H)."""
    # TODO(synk): the real base model is an arbitrary external nn.Module
    # (e.g. a 650M transformer); only its (B, S, H) sequence output matters
    # for this head, so a deterministic embedding lookup stands in for it.
    return embedding_table[input_ids]


def token_classifier_forward(input_ids, embedding_table, cls_weight, cls_bias,
                             attention_mask=None):
    # attention_mask unused in forward() (loss-only in the PyTorch module).
    seq_out = base_model(input_ids, embedding_table)          # (B, S, H)
    # classifier_features() is identity in the base class.
    logits = token_classifier_head(seq_out, cls_weight, cls_bias)
    return logits, seq_out


def xavier_uniform(key, shape):
    fan_out, fan_in = shape
    a = (6.0 / (fan_in + fan_out)) ** 0.5
    return jax.random.uniform(key, shape, jnp.float32, minval=-a, maxval=a)


if __name__ == "__main__":
    # Small shapes consistent with the module's forward.
    B, S, H, VOCAB, N_LABELS = 2, 8, 32, 64, 8

    key = jax.random.PRNGKey(0)
    k_emb, k_w, k_ids = jax.random.split(key, 3)

    # Deterministic synthetic "base" embedding table.
    embedding_table = jax.random.normal(k_emb, (VOCAB, H), jnp.float32) * 0.02
    # Classifier: nn.Linear(H, n_labels) with xavier_uniform weight, zero bias.
    cls_weight = xavier_uniform(k_w, (N_LABELS, H))
    cls_bias = jnp.zeros((N_LABELS,), jnp.float32)

    input_ids = jax.random.randint(k_ids, (B, S), 0, VOCAB)
    attention_mask = jnp.ones((B, S), jnp.int32)

    logits, seq_out = token_classifier_forward(
        input_ids, embedding_table, cls_weight, cls_bias, attention_mask)
    logits = jax.block_until_ready(logits)

    # Reference: plain-JAX f32 linear head (same math as the PyTorch module).
    ref_f32 = (seq_out.reshape(-1, H) @ cls_weight.T + cls_bias).reshape(
        B, S, N_LABELS)
    assert logits.shape == (B, S, N_LABELS)
    assert jnp.allclose(logits, ref_f32, atol=5e-3, rtol=5e-3), \
        "mismatch vs f32 reference"

    print("KERNEL_OK")
</pallas_src>

<mosaic_0001>
module attributes {stable_mosaic.version = 11 : i64} {
  func.func @_classifier_kernel(%arg0: i32, %arg1: memref<8x32xf32, #tpu.memory_space<vmem>>, %arg2: memref<32x8xf32, #tpu.memory_space<vmem>>, %arg3: memref<1x8xf32, #tpu.memory_space<vmem>>, %arg4: memref<8x8xf32, #tpu.memory_space<vmem>>) attributes {dimension_semantics = [#tpu.dimension_semantics<parallel>], iteration_bounds = array<i64: 2>, scalar_prefetch = 0 : i64, scratch_operands = 0 : i64, tpu.core_type = #tpu.core_type<tc>, window_params = [{transform_indices = @transform_0, window_bounds = array<i64: 8, 32>}, {pipeline_mode = #tpu.pipeline_mode<synchronous>, transform_indices = @transform_1, window_bounds = array<i64: 32, 8>}, {pipeline_mode = #tpu.pipeline_mode<synchronous>, transform_indices = @transform_2, window_bounds = array<i64: 1, 8>}, {transform_indices = @transform_3, window_bounds = array<i64: 8, 8>}]} {
    %c0 = arith.constant 0 : index
    %c0_0 = arith.constant 0 : index
    %0 = vector.load %arg1[%c0, %c0_0] : memref<8x32xf32, #tpu.memory_space<vmem>>, vector<8x32xf32>
    %c0_1 = arith.constant 0 : index
    %c0_2 = arith.constant 0 : index
    %1 = vector.load %arg2[%c0_1, %c0_2] : memref<32x8xf32, #tpu.memory_space<vmem>>, vector<32x8xf32>
    %cst = arith.constant dense<0.000000e+00> : vector<8x8xf32>
    %2 = tpu.matmul %0, %1, %cst {dimension_numbers = #tpu.dot_dimension_numbers<[1], [0], [0], [1], [0, 0, 1, 1], [], []>} : vector<8x32xf32>, vector<32x8xf32>, vector<8x8xf32> -> vector<8x8xf32>
    %c0_3 = arith.constant 0 : index
    %c0_4 = arith.constant 0 : index
    %3 = vector.load %arg3[%c0_3, %c0_4] : memref<1x8xf32, #tpu.memory_space<vmem>>, vector<1x8xf32>
    %4 = vector.broadcast %3 : vector<1x8xf32> to vector<8x8xf32>
    %5 = arith.addf %2, %4 : vector<8x8xf32>
    %c0_5 = arith.constant 0 : index
    %c0_6 = arith.constant 0 : index
    %6 = vector.load %arg4[%c0_5, %c0_6] : memref<8x8xf32, #tpu.memory_space<vmem>>, vector<8x8xf32>
    tpu.vector_store %arg4[%c0_5, %c0_6], %5 {strides = array<i32>} : memref<8x8xf32, #tpu.memory_space<vmem>>, vector<8x8xf32>,
    return
  }
  func.func @transform_0(%arg0: i32) -> (i32, i32) {
    %c0_i32 = arith.constant 0 : i32
    %c0_i32_0 = arith.constant 0 : i32
    return %arg0, %c0_i32 : i32, i32
  }
  func.func @transform_1(%arg0: i32) -> (i32, i32) {
    %c0_i32 = arith.constant 0 : i32
    %c0_i32_0 = arith.constant 0 : i32
    %c0_i32_1 = arith.constant 0 : i32
    return %c0_i32, %c0_i32_0 : i32, i32
  }
  func.func @transform_2(%arg0: i32) -> (i32, i32) {
    %c0_i32 = arith.constant 0 : i32
    %c0_i32_0 = arith.constant 0 : i32
    %c0_i32_1 = arith.constant 0 : i32
    return %c0_i32, %c0_i32_0 : i32, i32
  }
  func.func @transform_3(%arg0: i32) -> (i32, i32) {
    %c0_i32 = arith.constant 0 : i32
    %c0_i32_0 = arith.constant 0 : i32
    return %arg0, %c0_i32 : i32, i32
  }
}

</mosaic_0001>

<llo_original>
// kernel: tpu_custom_call.1
$region0: #{tpu_custom_call.1}
  #allocation0 [shape = 'u32[]', space=smem, size = 0x4, offset = 0x4, fixed_abs, tag = 'smem constant byte address 0x4 - core index']
  #allocation1 [shape = 'u32[144,128]{1,0:T(1,128)}', space=vmem, size = 0x12000, scoped, tag = 'internal scratch']
  %s0 = inlined_call_operand.vmem [shape: f32[16,32], index: 0, kind: input, shape index: {}]
  %s1 = inlined_call_operand.vmem [shape: f32[32,8], index: 1, kind: input, shape index: {}]
  %s2 = inlined_call_operand.vmem [shape: f32[1,8], index: 2, kind: input, shape index: {}]
  %s3 = inlined_call_operand.vmem [shape: f32[16,8], index: 3, kind: output, shape index: {}]
  %s4 = sld [smem:[#allocation0]]
  $region45: #{tpu_custom_call.1} parent=0
    _
  %s6 = ssub.s32 1, %s4
  %s7 = scalar_select 0, %s6, %s4
  loop: start=0, step=1, limit=4
  $region2: #{tpu_custom_call.1} parent=0 // loop_pre_header
    _
  $region3: #{tpu_custom_call.1} parent=0 // loop_header
    %s9 = sphi 0, %s13
    %p10 = scmp.ge.s32.totalorder %s9, 4
    %s19 = sphi 0, %s21
    %s22 = sphi 0, %s19
    %s23 = sphi 0, %s22
    %s39 = sphi 0, %s23
    %s43 = sphi 0, %s43
    %s45 = sphi 0, %s43
    %s46 = sphi 0, %s45
    %s60 = sphi 0, %s46
    %s64 = sphi 0, %s64
    %s66 = sphi 0, %s64
    %s67 = sphi 0, %s66
    %s81 = sphi 0, %s67
    %s87 = sphi 0, %s89
    %s90 = sphi 0, %s87
    %s91 = sphi 0, %s90
    %s107 = sphi 0, %s91
  $region4: #{tpu_custom_call.1} parent=0 // loop_header_branch
    %12 = sbr.rel (%p10) target = $region8
  $region5: #{tpu_custom_call.1} parent=0 // loop_body
    %s14 = ssub.s32 %s9, 1
    %s15 = ssub.s32 %s9, 2
    %s16 = sadd.s32 %s9, 1
    %s17 = ssub.s32 %s9, %s16
    %p18 = scmp.eq.s32.totalorder %s17, 0
    %s20 = sadd.s32 %s19, 1
    %s21 = scalar_select %p18, %s19, %s20
    %p24 = pneg %p18
    %p25 = scmp.eq.s32.totalorder %s9, 1
    %p26 = por %p24, %p25
    %p27 = scmp.ne.s32.totalorder %s19, %s22
    %p28 = scmp.eq.s32.totalorder %s9, 0
    %p29 = por %p27, %p28
    %p30 = scmp.ne.s32.totalorder %s19, %s22
    %p31 = scmp.eq.s32.totalorder %s14, 1
    %p32 = por %p30, %p31
    %p33 = scmp.ne.s32.totalorder %s22, %s23
    %p34 = scmp.eq.s32.totalorder %s14, 0
    %p35 = por %p33, %p34
    %p36 = scmp.ne.s32.totalorder %s22, %s23
    %p37 = scmp.eq.s32.totalorder %s15, 1
    %p38 = por %p36, %p37
    %p40 = scmp.ne.s32.totalorder %s23, %s39
    %p41 = scmp.eq.s32.totalorder %s15, 0
    %p42 = por %p40, %p41
    %s44 = sadd.s32 %s43, 1
    %p47 = scmp.eq.s32.totalorder %s9, 1
    %p48 = scmp.ne.s32.totalorder %s43, %s45
    %p49 = scmp.eq.s32.totalorder %s9, 0
    %p50 = por %p48, %p49
    %p51 = scmp.ne.s32.totalorder %s43, %s45
    %p52 = scmp.eq.s32.totalorder %s14, 1
    %p53 = por %p51, %p52
    %p54 = scmp.ne.s32.totalorder %s45, %s46
    %p55 = scmp.eq.s32.totalorder %s14, 0
    %p56 = por %p54, %p55
    %p57 = scmp.ne.s32.totalorder %s45, %s46
    %p58 = scmp.eq.s32.totalorder %s15, 1
    %p59 = por %p57, %p58
    %p61 = scmp.ne.s32.totalorder %s46, %s60
    %p62 = scmp.eq.s32.totalorder %s15, 0
    %p63 = por %p61, %p62
    %s65 = sadd.s32 %s64, 1
    %p68 = scmp.eq.s32.totalorder %s9, 1
    %p69 = scmp.ne.s32.totalorder %s64, %s66
    %p70 = scmp.eq.s32.totalorder %s9, 0
    %p71 = por %p69, %p70
    %p72 = scmp.ne.s32.totalorder %s64, %s66
    %p73 = scmp.eq.s32.totalorder %s14, 1
    %p74 = por %p72, %p73
    %p75 = scmp.ne.s32.totalorder %s66, %s67
    %p76 = scmp.eq.s32.totalorder %s14, 0
    %p77 = por %p75, %p76
    %p78 = scmp.ne.s32.totalorder %s66, %s67
    %p79 = scmp.eq.s32.totalorder %s15, 1
    %p80 = por %p78, %p79
    %p82 = scmp.ne.s32.totalorder %s67, %s81
    %p83 = scmp.eq.s32.totalorder %s15, 0
    %p84 = por %p82, %p83
    %s85 = ssub.s32 %s9, %s16
    %p86 = scmp.eq.s32.totalorder %s85, 0
    %s88 = sadd.s32 %s87, 1
    %s89 = scalar_select %p86, %s87, %s88
    %p92 = pneg %p86
    %p93 = scmp.eq.s32.totalorder %s9, 1
    %p94 = por %p92, %p93
    %p95 = scmp.ne.s32.totalorder %s87, %s90
    %p96 = scmp.eq.s32.totalorder %s9, 0
    %p97 = por %p95, %p96
    %p98 = scmp.ne.s32.totalorder %s87, %s90
    %p99 = scmp.eq.s32.totalorder %s14, 1
    %p100 = por %p98, %p99
    %p101 = scmp.ne.s32.totalorder %s90, %s91
    %p102 = scmp.eq.s32.totalorder %s14, 0
    %p103 = por %p101, %p102
    %p104 = scmp.ne.s32.totalorder %s90, %s91
    %p105 = scmp.eq.s32.totalorder %s15, 1
    %p106 = por %p104, %p105
    %p108 = scmp.ne.s32.totalorder %s91, %s107
    %p109 = scmp.eq.s32.totalorder %s15, 0
    %p110 = por %p108, %p109
    %p111 = scmp.le.s32.totalorder 1, %s9
    %p112 = scmp.lt.s32.totalorder %s9, 3
    %p113 = pnand %p111, %p112
    %p114 = pneg %p113
    // Predicated region
    $region9: #{tpu_custom_call.1} parent=5 // pred_check
      _
    $region10: #{tpu_custom_call.1} parent=5 // pred_check_branch
      %116 = sbr.rel (%p113) target = $region12
    $region11: #{tpu_custom_call.1} parent=5 // pred_region
      %s117 = ssub.s32 %s9, 1
      // Predicated region
      $region13: #{tpu_custom_call.1} parent=11 // pred_check
        %p118 = pneg %p56
      $region14: #{tpu_custom_call.1} parent=11 // pred_check_branch
        %120 = sbr.rel (%p118) target = $region16
      $region15: #{tpu_custom_call.1} parent=11 // pred_region
        _
      $region16: #{tpu_custom_call.1} parent=11 // pred_fallthru
        _
      // Predicated region
      $region17: #{tpu_custom_call.1} parent=11 // pred_check
        %p121 = pneg %p77
      $region18: #{tpu_custom_call.1} parent=11 // pred_check_branch
        %123 = sbr.rel (%p121) target = $region20
      $region19: #{tpu_custom_call.1} parent=11 // pred_region
        _
      $region20: #{tpu_custom_call.1} parent=11 // pred_fallthru
        _
    $region12: #{tpu_custom_call.1} parent=5 // pred_fallthru
      _
    %p124 = scmp.lt.s32.totalorder %s9, 2
    // Predicated region
    $region21: #{tpu_custom_call.1} parent=5 // pred_check
      %p125 = pneg %p124
    $region22: #{tpu_custom_call.1} parent=5 // pred_check_branch
      %127 = sbr.rel (%p125) target = $region24
    $region23: #{tpu_custom_call.1} parent=5 // pred_region
      // Predicated region
      $region25: #{tpu_custom_call.1} parent=23 // pred_check
        %p128 = pneg %p29
      $region26: #{tpu_custom_call.1} parent=23 // pred_check_branch
        %130 = sbr.rel (%p128) target = $region28
      $region27: #{tpu_custom_call.1} parent=23 // pred_region
        %p131 = scmp.lt.s32.totalorder %s9, 1
        %s132 = scalar_select %p131, %s9, 1
        %s133 = smul.addr %s132, 8
        %s134 = scalar_lea.vmem %s0, %s133
      $region28: #{tpu_custom_call.1} parent=23 // pred_fallthru
        _
    $region24: #{tpu_custom_call.1} parent=5 // pred_fallthru
      _
    %p135 = scmp.le.s32.totalorder 1, %s9
    %p136 = scmp.lt.s32.totalorder %s9, 3
    %p137 = pnand %p135, %p136
    %p138 = pneg %p137
    // Predicated region
    $region29: #{tpu_custom_call.1} parent=5 // pred_check
      _
    $region30: #{tpu_custom_call.1} parent=5 // pred_check_branch
      %140 = sbr.rel (%p137) target = $region32
    $region31: #{tpu_custom_call.1} parent=5 // pred_region
      %s141 = ssub.s32 %s9, 1
      %p142 = scmp.lt.s32.totalorder %s14, 1
      %s143 = scalar_select %p142, %s14, 1
      %s144 = smul.addr %s143, 8
      %s145 = scalar_lea.vmem %s0, %s144
      %p146 = pneg %p35
      %p147 = pneg %p32
      %p148 = pneg %p56
      %p149 = pneg %p53
      %p150 = pneg %p77
      %p151 = pneg %p74
      %p152 = pneg %p103
      %p153 = pneg %p100
      %p154 = scmp.lt.s32.totalorder %s14, 1
      %s155 = scalar_select %p154, %s14, 1
      %s156 = smul.addr %s155, 8
      %s157 = scalar_lea.vmem %s3, %s156
      %p158 = scmp.lt.s32.totalorder %s14, 1
      %s159 = scalar_select %p158, %s14, 1
      %s160 = smul.addr %s159, 8
      %s161 = scalar_lea.vmem %s0, %s160
      %p162 = scmp.lt.s32.totalorder %s14, 1
      %s163 = scalar_select %p162, %s14, 1
      %s164 = smul.addr %s163, 8
      %s165 = scalar_lea.vmem %s3, %s164
      %v166 = vld [vmem:[%s161] sm:$0xff]
      %v167 = vld [vmem:[%s1] sm:$0xff]
      %v168 = vld [vmem:[%s1 + $0x8] sm:$0xff]
      %v169 = vld [vmem:[%s1 + $0x10] sm:$0xff]
      %v170 = vld [vmem:[%s1 + $0x18] sm:$0xff]
      %v171 = vld [vmem:[%s2] sm:$0x1]
      %v173 = vlaneseq
      %v174 = vshrl.u32 %v173, 7
      %v175 = vsub.s32 0, %v174
      %v176 = vrot.slane %v171, %v175
      %vm178 = vcmask 261120
      %v180 = vsel %vm178, %v166, 0
      %182 = vmatprep.subr.mxu0 0.0
      %183 = vmatpush1.msra.mxu0 %v167
      %184 = vmatprep.subr.mxu0 0.0
      %185 = vmatpush1.msra.mxu0 %v168
      %186 = vmatprep.subr.mxu0 0.0
      %187 = vmatpush1.msra.mxu0 %v169
      %188 = vmatprep.subr.mxu0 0.0
      %189 = vmatpush1.msra.mxu0 %v170
      %190 = vmatprep.subr.mxu0 0.0
      %191 = vmatpush1.msra.mxu0 0.0
      %192 = vmatprep.subr.mxu0 0.0
      %193 = vmatpush1.msra.mxu0 0.0
      %194 = vmatprep.subr.mxu0 0.0
      %195 = vmatpush1.msra.mxu0 0.0
      %196 = vmatprep.subr.mxu0 0.0
      %197 = vmatpush1.msra.mxu0 0.0
      %198 = vmatprep.subr.mxu0 0.0
      %199 = vmatpush1.msra.mxu0 0.0
      %200 = vmatprep.subr.mxu0 0.0
      %201 = vmatpush1.msra.mxu0 0.0
      %202 = vmatprep.subr.mxu0 0.0
      %203 = vmatpush1.msra.mxu0 0.0
      %204 = vmatprep.subr.mxu0 0.0
      %205 = vmatpush1.msra.mxu0 0.0
      %206 = vmatprep.subr.mxu0 0.0
      %207 = vmatpush1.msra.mxu0 0.0
      %208 = vmatprep.subr.mxu0 0.0
      %209 = vmatpush1.msra.mxu0 0.0
      %210 = vmatprep.subr.mxu0 0.0
      %211 = vmatpush1.msra.mxu0 0.0
      %212 = vmatprep.subr.mxu0 0.0
      %213 = vmatpush1.msra.mxu0 0.0
      %214 = vmatprep.subr.mxu0 0.0
      %215 = vmatpush1.msra.mxu0 0.0
      %216 = vmatprep.subr.mxu0 0.0
      %217 = vmatpush1.msra.mxu0 0.0
      %218 = vmatprep.subr.mxu0 0.0
      %219 = vmatpush1.msra.mxu0 0.0
      %220 = vmatprep.subr.mxu0 0.0
      %221 = vmatpush1.msra.mxu0 0.0
      %222 = vmatprep.subr.mxu0 0.0
      %223 = vmatpush1.msra.mxu0 0.0
      %224 = vmatprep.subr.mxu0 0.0
      %225 = vmatpush1.msra.mxu0 0.0
      %226 = vmatprep.subr.mxu0 0.0
      %227 = vmatpush1.msra.mxu0 0.0
      %228 = vmatprep.subr.mxu0 0.0
      %229 = vmatpush1.msra.mxu0 0.0
      %230 = vmatprep.subr.mxu0 0.0
      %231 = vmatpush1.msra.mxu0 0.0
      %232 = vmatprep.subr.mxu0 0.0
      %233 = vmatpush1.msra.mxu0 0.0
      %234 = vmatprep.subr.mxu0 0.0
      %235 = vmatpush1.msra.mxu0 0.0
      %236 = vmatprep.subr.mxu0 0.0
      %237 = vmatpush1.msra.mxu0 0.0
      %238 = vmatprep.subr.mxu0 0.0
      %239 = vmatpush1.msra.mxu0 0.0
      %240 = vmatprep.subr.mxu0 0.0
      %241 = vmatpush1.msra.mxu0 0.0
      %242 = vmatprep.subr.mxu0 0.0
      %243 = vmatpush1.msra.mxu0 0.0
      %244 = vmatprep.subr.mxu0 0.0
      %245 = vmatpush1.msra.mxu0 0.0
      %246 = vmatprep.mubr.f32.mxu0 0.0
      %247 = vmatmul.mubr.f32.gmra.mrb[0].mxu0 %v180
      %v248 = vpop.f32.mrb[0].mxu0
      %v249 = vadd.f32 %v176, %v248
      %v250 = vpop.f32.mrb[0].mxu0
      %251 = vdwg.mxu0
      %vm252 = vcmask 64512
      %253 = vst.msk [vmem:[%s165] sm:$0xff] %vm252, %v249
      %p254 = scmp.lt.s32.totalorder %s14, 1
      %s255 = scalar_select %p254, %s14, 1
      %s256 = smul.addr %s255, 8
      %s257 = scalar_lea.vmem %s3, %s256
      // Predicated region
      $region33: #{tpu_custom_call.1} parent=31 // pred_check
        %p258 = pneg %p100
      $region34: #{tpu_custom_call.1} parent=31 // pred_check_branch
        %260 = sbr.rel (%p258) target = $region36
      $region35: #{tpu_custom_call.1} parent=31 // pred_region
        _
      $region36: #{tpu_custom_call.1} parent=31 // pred_fallthru
        _
    $region32: #{tpu_custom_call.1} parent=5 // pred_fallthru
      _
    %p261 = scmp.le.s32.totalorder 2, %s9
    // Predicated region
    $region37: #{tpu_custom_call.1} parent=5 // pred_check
      %p262 = pneg %p261
    $region38: #{tpu_custom_call.1} parent=5 // pred_check_branch
      %264 = sbr.rel (%p262) target = $region40
    $region39: #{tpu_custom_call.1} parent=5 // pred_region
      %s265 = ssub.s32 %s9, 2
      // Predicated region
      $region41: #{tpu_custom_call.1} parent=39 // pred_check
        %p266 = pneg %p106
      $region42: #{tpu_custom_call.1} parent=39 // pred_check_branch
        %268 = sbr.rel (%p266) target = $region44
      $region43: #{tpu_custom_call.1} parent=39 // pred_region
        %p269 = scmp.lt.s32.totalorder %s15, 1
        %s270 = scalar_select %p269, %s15, 1
        %s271 = smul.addr %s270, 8
        %s272 = scalar_lea.vmem %s3, %s271
      $region44: #{tpu_custom_call.1} parent=39 // pred_fallthru
        _
    $region40: #{tpu_custom_call.1} parent=5 // pred_fallthru
      _
  $region6: #{tpu_custom_call.1} parent=0 // loop_footer
    %s13 = sadd.s32 1, %s9
  $region7: #{tpu_custom_call.1} parent=0 // loop_footer_branch
    %8 = sbr.rel target = $region3
  $region8: #{tpu_custom_call.1} parent=0 // loop_exit
    _

</llo_original>
